<compile_context>
chip_gen: v7x
topology: tpu7x:2x2x1
jax: 0.10.0
libtpu: 0.0.40
codegen_flags: <defaults>
</compile_context>

<pallas_src>
import functools

import numpy as np
import jax
import jax.numpy as jnp
from jax import lax
from jax.experimental import pallas as pl
from jax.experimental.pallas import tpu as pltpu


_NSPLIT = 2  # leading "parallel" grid axis: 2 TCs on v7x, harmless elsewhere


def _round_up(x, m):
    return ((x + m - 1) // m) * m


# ----------------------------------------------------------------------------
# Pair selector.  The kernel path implements the all-pairs selector (all i < j;
# positive iff labels match) directly from the labels, fully on device.
# TODO(synk): generic index-list pair selectors (arbitrary `get_pairs`) would
# need a PrefetchScalarGridSpec / pl.Element row-gather path instead.
# ----------------------------------------------------------------------------
class AllPairSelector:
    # Host-side enumeration kept ONLY for the pure-JAX reference check.
    def get_pairs(self, embeddings, target):
        labels = np.asarray(jax.device_get(target))
        pos, neg = [], []
        b = labels.shape[0]
        for i in range(b):
            for j in range(i + 1, b):
                (pos if labels[i] == labels[j] else neg).append((i, j))
        return (np.asarray(pos, np.int32).reshape(-1, 2),
                np.asarray(neg, np.int32).reshape(-1, 2))


# ----------------------------------------------------------------------------
# Pallas kernel: per row-tile Gram block + on-the-fly masks + contrastive sum.
# ----------------------------------------------------------------------------
def _loss_kernel(margin, b_actual, e_all_ref, nrm_ref, lab_row_ref, lab_col_ref,
                 out_ref, sum_acc, cnt_acc):
    s = pl.program_id(0)
    t = pl.program_id(1)
    tps = pl.num_programs(1)

    @pl.when(t == 0)
    def _():
        sum_acc[...] = jnp.zeros_like(sum_acc)
        cnt_acc[...] = jnp.zeros_like(cnt_acc)

    tb = lab_row_ref.shape[0]                              # static tile size
    blk = s * tps + t                                      # global row-tile idx
    row_start = pl.multiple_of(blk * tb, tb)               # aligned sublane start

    e_all = e_all_ref[...]                                 # (Bp, Dp) f32, resident
    e_blk = e_all_ref[pl.ds(row_start, tb), :]             # (TB, Dp) VMEM slice

    # Gram block on the MXU (no materialized transpose): (TB, Bp)
    g = lax.dot_general(e_blk, e_all, (((1,), (1,)), ((), ())),
                        preferred_element_type=jnp.float32)
    n_blk = jnp.sum(e_blk * e_blk, axis=1, keepdims=True)  # (TB, 1)
    n_all = nrm_ref[...]                                   # (1, Bp), resident
    d2 = jnp.maximum(n_blk + n_all - 2.0 * g, 0.0)         # ||e_i - e_j||^2

    # Pos/neg pair masks built on the fly from labels (VPU, no HBM traffic).
    lab_r = lab_row_ref[...]                               # (TB, 1) int32
    lab_c = lab_col_ref[...]                               # (1, Bp) int32
    i_idx = row_start + lax.broadcasted_iota(jnp.int32, d2.shape, 0)
    j_idx = lax.broadcasted_iota(jnp.int32, d2.shape, 1)
    pair_ok = (i_idx < j_idx) & (i_idx < b_actual) & (j_idx < b_actual)
    same = lab_r == lab_c                                  # (TB, Bp) via bcast
    pos_m = (pair_ok & same).astype(jnp.float32)
    neg_m = (pair_ok & jnp.logical_not(same)).astype(jnp.float32)

    pos_term = jnp.sum(pos_m * d2)
    hinge = jnp.maximum(margin - jnp.sqrt(d2), 0.0)
    neg_term = jnp.sum(neg_m * (hinge * hinge))
    cnt = jnp.sum(pos_m) + jnp.sum(neg_m)

    sum_acc[...] += pos_term + neg_term
    cnt_acc[...] += cnt

    @pl.when(t == tps - 1)
    def _():
        # Per-split partial results into an aligned (8, 128) block:
        # column 0 = sum of losses, column 1 = pair count.
        col = lax.broadcasted_iota(jnp.int32, out_ref.shape, 1)
        sm = jnp.broadcast_to(sum_acc[...], out_ref.shape)
        cm = jnp.broadcast_to(cnt_acc[...], out_ref.shape)
        out_ref[...] = jnp.where(col == 0, sm, cm)


# ----------------------------------------------------------------------------
# Module-equivalent wrapper.
# ----------------------------------------------------------------------------
class OnlineContrastiveLoss:
    def __init__(self, margin, pair_selector, block_rows=128):
        self.margin = float(margin)
        self.pair_selector = pair_selector        # semantics baked into kernel
        self.block_rows = int(block_rows)

    def __call__(self, embeddings, target):
        emb = jnp.asarray(embeddings, jnp.float32)
        b, d = emb.shape

        tb = min(self.block_rows, _round_up(max(b, 1), 8))
        tb = max(8, (tb // 8) * 8)
        bp = _round_up(b, tb * _NSPLIT)                     # padded rows
        dp = _round_up(d, 128)                              # lane-dense features
        tps = (bp // tb) // _NSPLIT                         # inner grid extent

        emb_p = jnp.pad(emb, ((0, bp - b), (0, dp - d)))
        norms = jnp.sum(emb_p * emb_p, axis=1)[None, :]     # (1, Bp)

        lab = jnp.pad(jnp.asarray(target, jnp.int32), (0, bp - b),
                      constant_values=-1)
        lab_row = lab[:, None]                              # (Bp, 1)
        lab_col = lab[None, :]                              # (1, Bp)

        kernel = functools.partial(_loss_kernel, self.margin, b)

        # Explicit scoped-VMEM budget: raises v5e's 16 MiB default where needed,
        # stays well under v7x's 64 MiB physical VMEM.
        # NOTE: the full (Bp, Dp) embedding block is VMEM-resident, so this
        # design targets batch sizes whose embeddings fit comfortably in VMEM.
        vmem_est = (bp * dp * 4                      # resident full embeddings
                    + 4 * bp * 4                     # norms + column labels
                    + 4 * tb * 4                     # double-buffered row labels
                    + 10 * tb * bp * 4)              # in-kernel temporaries
        vmem_limit = int(min(48 * 1024 * 1024,
                             max(8 * 1024 * 1024, 4 * vmem_est)))

        out = pl.pallas_call(
            kernel,
            out_shape=jax.ShapeDtypeStruct((_NSPLIT * 8, 128), jnp.float32),
            grid=(_NSPLIT, tps),
            in_specs=[
                pl.BlockSpec((bp, dp), lambda s, t: (0, 0)),            # full E (resident)
                pl.BlockSpec((1, bp), lambda s, t: (0, 0)),             # row norms
                pl.BlockSpec((tb, 1), lambda s, t: (s * tps + t, 0)),   # row-label tile
                pl.BlockSpec((1, bp), lambda s, t: (0, 0)),             # column labels
            ],
            out_specs=pl.BlockSpec((8, 128), lambda s, t: (s, 0)),
            scratch_shapes=[pltpu.VMEM((1, 1), jnp.float32),
                            pltpu.VMEM((1, 1), jnp.float32)],
            compiler_params=pltpu.CompilerParams(
                dimension_semantics=("parallel", "arbitrary"),
                vmem_limit_bytes=vmem_limit),
        )(emb_p, norms, lab_row, lab_col)

        parts = out.reshape(_NSPLIT, 8, 128)
        total = jnp.sum(parts[:, 0, 0])
        count = jnp.sum(parts[:, 0, 1])
        # Guard the empty-pair edge case (B < 2).
        return jnp.where(count > 0, total / count, jnp.float32(0.0))


# Pure-JAX reference (mirrors the torch forward exactly) for correctness check.
def _reference_loss(emb, pos_pairs, neg_pairs, margin):
    emb = jnp.asarray(emb, jnp.float32)
    pos = jnp.sum((emb[pos_pairs[:, 0]] - emb[pos_pairs[:, 1]]) ** 2, axis=1)
    negd = jnp.sqrt(
        jnp.sum((emb[neg_pairs[:, 0]] - emb[neg_pairs[:, 1]]) ** 2, axis=1))
    neg = jnp.maximum(margin - negd, 0.0) ** 2
    return jnp.mean(jnp.concatenate([pos, neg], axis=0))


if __name__ == "__main__":
    B, D = 8, 32
    margin = 1.0

    key = jax.random.PRNGKey(0)
    embeddings = jax.random.normal(key, (B, D), dtype=jnp.float32)
    # Deterministic labels (3 classes) -> both positive and negative pairs.
    target = jnp.array([0, 0, 1, 1, 2, 2, 0, 1], dtype=jnp.int32)

    selector = AllPairSelector()
    loss_mod = OnlineContrastiveLoss(margin, selector)
    loss = jax.block_until_ready(loss_mod(embeddings, target))

    # Sanity check against the pure-JAX (torch-equivalent) reference.
    pos_pairs, neg_pairs = selector.get_pairs(embeddings, target)
    ref = _reference_loss(embeddings, jnp.asarray(pos_pairs),
                          jnp.asarray(neg_pairs), margin)
    assert np.allclose(np.asarray(loss), np.asarray(ref),
                       rtol=1e-4, atol=1e-5), (loss, ref)

    print("KERNEL_OK")
</pallas_src>

<mosaic_0001>
module attributes {stable_mosaic.version = 11 : i64} {
  func.func @_loss_kernel(%arg0: i32, %arg1: i32, %arg2: memref<16x128xf32, #tpu.memory_space<vmem>>, %arg3: memref<1x16xf32, #tpu.memory_space<vmem>>, %arg4: memref<8x1xi32, #tpu.memory_space<vmem>>, %arg5: memref<1x16xi32, #tpu.memory_space<vmem>>, %arg6: memref<8x128xf32, #tpu.memory_space<vmem>>, %arg7: memref<1x1xf32, #tpu.memory_space<vmem>>, %arg8: memref<1x1xf32, #tpu.memory_space<vmem>>) attributes {dimension_semantics = [#tpu.dimension_semantics<parallel>, #tpu.dimension_semantics<arbitrary>], iteration_bounds = array<i64: 2, 1>, scalar_prefetch = 0 : i64, scratch_operands = 2 : i64, tpu.core_type = #tpu.core_type<tc>, window_params = [{pipeline_mode = #tpu.pipeline_mode<synchronous>, transform_indices = @transform_0, window_bounds = array<i64: 16, 128>}, {pipeline_mode = #tpu.pipeline_mode<synchronous>, transform_indices = @transform_1, window_bounds = array<i64: 1, 16>}, {transform_indices = @transform_2, window_bounds = array<i64: 8, 1>}, {pipeline_mode = #tpu.pipeline_mode<synchronous>, transform_indices = @transform_3, window_bounds = array<i64: 1, 16>}, {transform_indices = @transform_4, window_bounds = array<i64: 8, 128>}]} {
    %c0_i32 = arith.constant 0 : i32
    %0 = arith.cmpi eq, %arg1, %c0_i32 : i32
    %1 = arith.extui %0 : i1 to i32
    %c0_i32_0 = arith.constant 0 : i32
    %2 = arith.cmpi ne, %1, %c0_i32_0 : i32
    scf.if %2 {
      %cst_31 = arith.constant 0.000000e+00 : f32
      %83 = vector.broadcast %cst_31 : f32 to vector<1x1xf32>
      %c0_32 = arith.constant 0 : index
      %c0_33 = arith.constant 0 : index
      %84 = vector.load %arg7[%c0_32, %c0_33] : memref<1x1xf32, #tpu.memory_space<vmem>>, vector<1x1xf32>
      tpu.vector_store %arg7[%c0_32, %c0_33], %83 {strides = array<i32>} : memref<1x1xf32, #tpu.memory_space<vmem>>, vector<1x1xf32>,
      %cst_34 = arith.constant 0.000000e+00 : f32
      %85 = vector.broadcast %cst_34 : f32 to vector<1x1xf32>
      %c0_35 = arith.constant 0 : index
      %c0_36 = arith.constant 0 : index
      %86 = vector.load %arg8[%c0_35, %c0_36] : memref<1x1xf32, #tpu.memory_space<vmem>>, vector<1x1xf32>
      tpu.vector_store %arg8[%c0_35, %c0_36], %85 {strides = array<i32>} : memref<1x1xf32, #tpu.memory_space<vmem>>, vector<1x1xf32>,
    } else {
    }
    %c1_i32 = arith.constant 1 : i32
    %3 = arith.muli %arg0, %c1_i32 : i32
    %4 = arith.addi %3, %arg1 : i32
    %c8_i32 = arith.constant 8 : i32
    %5 = arith.muli %4, %c8_i32 : i32
    %6 = tpu.assume_multiple %5, 8 : i32
    %c0 = arith.constant 0 : index
    %c0_1 = arith.constant 0 : index
    %7 = vector.load %arg2[%c0, %c0_1] : memref<16x128xf32, #tpu.memory_space<vmem>>, vector<16x128xf32>
    %8 = arith.index_cast %6 : i32 to index
    %c0_2 = arith.constant 0 : index
    %9 = vector.load %arg2[%8, %c0_2] : memref<16x128xf32, #tpu.memory_space<vmem>>, vector<8x128xf32>
    %cst = arith.constant dense<0.000000e+00> : vector<8x16xf32>
    %10 = tpu.matmul %9, %7, %cst {dimension_numbers = #tpu.dot_dimension_numbers<[1], [1], [0], [0], [0, 0, 1, 0], [], []>} : vector<8x128xf32>, vector<16x128xf32>, vector<8x16xf32> -> vector<8x16xf32>
    %11 = arith.mulf %9, %9 : vector<8x128xf32>
    %cst_3 = arith.constant dense<0.000000e+00> : vector<8xf32>
    %12 = vector.multi_reduction <add>, %11, %cst_3 [1] : vector<8x128xf32> to vector<8xf32>
    %13 = vector.shape_cast %12 : vector<8xf32> to vector<8x1xf32>
    %c0_4 = arith.constant 0 : index
    %c0_5 = arith.constant 0 : index
    %14 = vector.load %arg3[%c0_4, %c0_5] : memref<1x16xf32, #tpu.memory_space<vmem>>, vector<1x16xf32>
    %15 = vector.broadcast %13 : vector<8x1xf32> to vector<8x16xf32>
    %16 = vector.broadcast %14 : vector<1x16xf32> to vector<8x16xf32>
    %17 = arith.addf %15, %16 : vector<8x16xf32>
    %cst_6 = arith.constant 2.000000e+00 : f32
    %18 = vector.broadcast %cst_6 : f32 to vector<8x16xf32>
    %19 = arith.mulf %18, %10 : vector<8x16xf32>
    %20 = arith.subf %17, %19 : vector<8x16xf32>
    %cst_7 = arith.constant 0.000000e+00 : f32
    %21 = vector.broadcast %cst_7 : f32 to vector<8x16xf32>
    %22 = arith.maximumf %20, %21 : vector<8x16xf32>
    %c0_8 = arith.constant 0 : index
    %c0_9 = arith.constant 0 : index
    %23 = vector.load %arg4[%c0_8, %c0_9] : memref<8x1xi32, #tpu.memory_space<vmem>>, vector<8x1xi32>
    %c0_10 = arith.constant 0 : index
    %c0_11 = arith.constant 0 : index
    %24 = vector.load %arg5[%c0_10, %c0_11] : memref<1x16xi32, #tpu.memory_space<vmem>>, vector<1x16xi32>
    %25 = tpu.iota {dimensions = array<i32: 0>} : vector<8x16xi32>
    %26 = vector.broadcast %6 : i32 to vector<8x16xi32>
    %27 = arith.addi %26, %25 : vector<8x16xi32>
    %28 = tpu.iota {dimensions = array<i32: 1>} : vector<8x16xi32>
    %29 = arith.cmpi slt, %27, %28 : vector<8x16xi32>
    %c8_i32_12 = arith.constant 8 : i32
    %30 = vector.broadcast %c8_i32_12 : i32 to vector<8x16xi32>
    %31 = arith.cmpi slt, %27, %30 : vector<8x16xi32>
    %32 = arith.andi %29, %31 : vector<8x16xi1>
    %c8_i32_13 = arith.constant 8 : i32
    %33 = vector.broadcast %c8_i32_13 : i32 to vector<8x16xi32>
    %34 = arith.cmpi slt, %28, %33 : vector<8x16xi32>
    %35 = arith.andi %32, %34 : vector<8x16xi1>
    %36 = vector.broadcast %23 : vector<8x1xi32> to vector<8x16xi32>
    %37 = vector.broadcast %24 : vector<1x16xi32> to vector<8x16xi32>
    %38 = arith.cmpi eq, %36, %37 : vector<8x16xi32>
    %39 = arith.andi %35, %38 : vector<8x16xi1>
    %40 = arith.extui %39 : vector<8x16xi1> to vector<8x16xi32>
    %41 = arith.sitofp %40 : vector<8x16xi32> to vector<8x16xf32>
    %cst_14 = arith.constant dense<true> : vector<8x16xi1>
    %42 = arith.xori %38, %cst_14 : vector<8x16xi1>
    %43 = arith.andi %35, %42 : vector<8x16xi1>
    %44 = arith.extui %43 : vector<8x16xi1> to vector<8x16xi32>
    %45 = arith.sitofp %44 : vector<8x16xi32> to vector<8x16xf32>
    %46 = arith.mulf %41, %22 : vector<8x16xf32>
    %47 = vector.shape_cast %46 : vector<8x16xf32> to vector<1x8x16xf32>
    %cst_15 = arith.constant dense<0.000000e+00> : vector<1xf32>
    %48 = vector.multi_reduction <add>, %47, %cst_15 [1, 2] : vector<1x8x16xf32> to vector<1xf32>
    %49 = vector.shape_cast %48 : vector<1xf32> to vector<1x1x1xf32>
    %50 = vector.extract %49[0, 0, 0] : f32 from vector<1x1x1xf32>
    %51 = math.sqrt %22 : vector<8x16xf32>
    %cst_16 = arith.constant 1.000000e+00 : f32
    %52 = vector.broadcast %cst_16 : f32 to vector<8x16xf32>
    %53 = arith.subf %52, %51 : vector<8x16xf32>
    %cst_17 = arith.constant 0.000000e+00 : f32
    %54 = vector.broadcast %cst_17 : f32 to vector<8x16xf32>
    %55 = arith.maximumf %53, %54 : vector<8x16xf32>
    %56 = arith.mulf %55, %55 : vector<8x16xf32>
    %57 = arith.mulf %45, %56 : vector<8x16xf32>
    %58 = vector.shape_cast %57 : vector<8x16xf32> to vector<1x8x16xf32>
    %cst_18 = arith.constant dense<0.000000e+00> : vector<1xf32>
    %59 = vector.multi_reduction <add>, %58, %cst_18 [1, 2] : vector<1x8x16xf32> to vector<1xf32>
    %60 = vector.shape_cast %59 : vector<1xf32> to vector<1x1x1xf32>
    %61 = vector.extract %60[0, 0, 0] : f32 from vector<1x1x1xf32>
    %62 = vector.shape_cast %41 : vector<8x16xf32> to vector<1x8x16xf32>
    %cst_19 = arith.constant dense<0.000000e+00> : vector<1xf32>
    %63 = vector.multi_reduction <add>, %62, %cst_19 [1, 2] : vector<1x8x16xf32> to vector<1xf32>
    %64 = vector.shape_cast %63 : vector<1xf32> to vector<1x1x1xf32>
    %65 = vector.extract %64[0, 0, 0] : f32 from vector<1x1x1xf32>
    %66 = vector.shape_cast %45 : vector<8x16xf32> to vector<1x8x16xf32>
    %cst_20 = arith.constant dense<0.000000e+00> : vector<1xf32>
    %67 = vector.multi_reduction <add>, %66, %cst_20 [1, 2] : vector<1x8x16xf32> to vector<1xf32>
    %68 = vector.shape_cast %67 : vector<1xf32> to vector<1x1x1xf32>
    %69 = vector.extract %68[0, 0, 0] : f32 from vector<1x1x1xf32>
    %70 = arith.addf %65, %69 : f32
    %c0_21 = arith.constant 0 : index
    %c0_22 = arith.constant 0 : index
    %71 = vector.load %arg7[%c0_21, %c0_22] : memref<1x1xf32, #tpu.memory_space<vmem>>, vector<1x1xf32>
    %72 = arith.addf %50, %61 : f32
    %73 = vector.broadcast %72 : f32 to vector<1x1xf32>
    %74 = arith.addf %71, %73 : vector<1x1xf32>
    %c0_23 = arith.constant 0 : index
    %c0_24 = arith.constant 0 : index
    %75 = vector.load %arg7[%c0_23, %c0_24] : memref<1x1xf32, #tpu.memory_space<vmem>>, vector<1x1xf32>
    tpu.vector_store %arg7[%c0_23, %c0_24], %74 {strides = array<i32>} : memref<1x1xf32, #tpu.memory_space<vmem>>, vector<1x1xf32>,
    %c0_25 = arith.constant 0 : index
    %c0_26 = arith.constant 0 : index
    %76 = vector.load %arg8[%c0_25, %c0_26] : memref<1x1xf32, #tpu.memory_space<vmem>>, vector<1x1xf32>
    %77 = vector.broadcast %70 : f32 to vector<1x1xf32>
    %78 = arith.addf %76, %77 : vector<1x1xf32>
    %c0_27 = arith.constant 0 : index
    %c0_28 = arith.constant 0 : index
    %79 = vector.load %arg8[%c0_27, %c0_28] : memref<1x1xf32, #tpu.memory_space<vmem>>, vector<1x1xf32>
    tpu.vector_store %arg8[%c0_27, %c0_28], %78 {strides = array<i32>} : memref<1x1xf32, #tpu.memory_space<vmem>>, vector<1x1xf32>,
    %c0_i32_29 = arith.constant 0 : i32
    %80 = arith.cmpi eq, %arg1, %c0_i32_29 : i32
    %81 = arith.extui %80 : i1 to i32
    %c0_i32_30 = arith.constant 0 : i32
    %82 = arith.cmpi ne, %81, %c0_i32_30 : i32
    scf.if %82 {
      %83 = tpu.iota {dimensions = array<i32: 1>} : vector<8x128xi32>
      %c0_31 = arith.constant 0 : index
      %c0_32 = arith.constant 0 : index
      %84 = vector.load %arg7[%c0_31, %c0_32] : memref<1x1xf32, #tpu.memory_space<vmem>>, vector<1x1xf32>
      %85 = vector.shape_cast %84 : vector<1x1xf32> to vector<1x1xf32>
      %86 = vector.broadcast %85 : vector<1x1xf32> to vector<8x128xf32>
      %c0_33 = arith.constant 0 : index
      %c0_34 = arith.constant 0 : index
      %87 = vector.load %arg8[%c0_33, %c0_34] : memref<1x1xf32, #tpu.memory_space<vmem>>, vector<1x1xf32>
      %88 = vector.shape_cast %87 : vector<1x1xf32> to vector<1x1xf32>
      %89 = vector.broadcast %88 : vector<1x1xf32> to vector<8x128xf32>
      %c0_i32_35 = arith.constant 0 : i32
      %90 = vector.broadcast %c0_i32_35 : i32 to vector<8x128xi32>
      %91 = arith.cmpi eq, %83, %90 : vector<8x128xi32>
      %92 = arith.select %91, %86, %89 : vector<8x128xi1>, vector<8x128xf32>
      %c0_36 = arith.constant 0 : index
      %c0_37 = arith.constant 0 : index
      %93 = vector.load %arg6[%c0_36, %c0_37] : memref<8x128xf32, #tpu.memory_space<vmem>>, vector<8x128xf32>
      tpu.vector_store %arg6[%c0_36, %c0_37], %92 {strides = array<i32>} : memref<8x128xf32, #tpu.memory_space<vmem>>, vector<8x128xf32>,
    } else {
    }
    return
  }
  func.func @transform_0(%arg0: i32, %arg1: i32) -> (i32, i32) {
    %c0_i32 = arith.constant 0 : i32
    %c0_i32_0 = arith.constant 0 : i32
    %c0_i32_1 = arith.constant 0 : i32
    return %c0_i32, %c0_i32_0 : i32, i32
  }
  func.func @transform_1(%arg0: i32, %arg1: i32) -> (i32, i32) {
    %c0_i32 = arith.constant 0 : i32
    %c0_i32_0 = arith.constant 0 : i32
    %c0_i32_1 = arith.constant 0 : i32
    return %c0_i32, %c0_i32_0 : i32, i32
  }
  func.func @transform_2(%arg0: i32, %arg1: i32) -> (i32, i32) {
    %c1_i32 = arith.constant 1 : i32
    %0 = arith.muli %arg0, %c1_i32 : i32
    %1 = arith.addi %0, %arg1 : i32
    %c0_i32 = arith.constant 0 : i32
    %c0_i32_0 = arith.constant 0 : i32
    return %1, %c0_i32 : i32, i32
  }
  func.func @transform_3(%arg0: i32, %arg1: i32) -> (i32, i32) {
    %c0_i32 = arith.constant 0 : i32
    %c0_i32_0 = arith.constant 0 : i32
    %c0_i32_1 = arith.constant 0 : i32
    return %c0_i32, %c0_i32_0 : i32, i32
  }
  func.func @transform_4(%arg0: i32, %arg1: i32) -> (i32, i32) {
    %c0_i32 = arith.constant 0 : i32
    %c0_i32_0 = arith.constant 0 : i32
    return %arg0, %c0_i32 : i32, i32
  }
}

</mosaic_0001>

<llo_original>
// kernel: tpu_custom_call.1
$region0: #{tpu_custom_call.1}
  #allocation0 [shape = 'u32[]', space=smem, size = 0x4, offset = 0x4, fixed_abs, tag = 'smem constant byte address 0x4 - core index']
  #allocation1 [shape = 'u32[144,128]{1,0:T(1,128)}', space=vmem, size = 0x12000, scoped, tag = 'internal scratch']
  #allocation2 [shape = 'f32[1,1]{1,0:T(1,128)}', space=vmem, size = 0x200, scoped, tag = 'scratch operand']
  #allocation3 [shape = 'f32[1,1]{1,0:T(1,128)}', space=vmem, size = 0x200, scoped, tag = 'scratch operand']
  %s0 = inlined_call_operand.vmem [shape: f32[16,128], index: 0, kind: input, shape index: {}]
  %s1 = inlined_call_operand.vmem [shape: f32[1,16], index: 1, kind: input, shape index: {}]
  %s2 = inlined_call_operand.vmem [shape: s32[16,1], index: 2, kind: input, shape index: {}]
  %s3 = inlined_call_operand.vmem [shape: s32[1,16], index: 3, kind: input, shape index: {}]
  %s4 = inlined_call_operand.hbm [shape: f32[16,128], index: 4, kind: output, shape index: {}]
  %s5 = sld [smem:[#allocation0]]
  $region57: #{tpu_custom_call.1} parent=0
    _
  %s7 = ssub.s32 1, %s5
  %s8 = scalar_select 0, %s7, %s5
  $region1: #{tpu_custom_call.1} parent=0
    #allocation4 [shape = 'u8[8192]{0}', space=vmem, size = 0x2000, scoped, tag = 'output window, operand 0']
    #allocation5 [shape = 's32[2]{0}', space=sflag, size = 0x8, scoped, tag = 'scoped memory for tpu_custom_call.1']
    %9 = vsyncpa [#allocation5], 0
    %s10 = scalar_lea.sflag [#allocation5], 1
    %11 = vsyncpa %s10, 0
    loop: start=0, step=1, limit=4
    $region2: #{tpu_custom_call.1} parent=1 // loop_pre_header
      _
    $region3: #{tpu_custom_call.1} parent=1 // loop_header
      %s13 = sphi 0, %s17
      %p14 = scmp.ge.s32.totalorder %s13, 4
      %s20 = sphi 0, %s32
      %s21 = sphi 0, %s28
      %s22 = sphi 0, %s20
      %s23 = sphi 0, %s21
      %s24 = sphi 0, %s22
      %s25 = sphi 0, %s23
      %s33 = sphi 0, %s33
      %s35 = sphi 0, %s33
      %s36 = sphi 0, %s35
      %s50 = sphi 0, %s36
      %s54 = sphi 0, %s54
      %s56 = sphi 0, %s54
      %s57 = sphi 0, %s56
      %s71 = sphi 0, %s57
      %s79 = sphi 0, %s81
      %s82 = sphi 0, %s79
      %s83 = sphi 0, %s82
      %s99 = sphi 0, %s83
      %s103 = sphi 0, %s103
      %s105 = sphi 0, %s103
      %s106 = sphi 0, %s105
      %s120 = sphi 0, %s106
      %s126 = sphi 0, %s128
      %s129 = sphi 0, %s126
      %s130 = sphi 0, %s129
      %s146 = sphi 0, %s130
    $region4: #{tpu_custom_call.1} parent=1 // loop_header_branch
      %16 = sbr.rel (%p14) target = $region8
    $region5: #{tpu_custom_call.1} parent=1 // loop_body
      %s18 = ssub.s32 %s13, 1
      %s19 = ssub.s32 %s13, 2
      %s26 = sadd.s32 1, %s21
      %p27 = scmp.ge.s32.totalorder %s26, 1
      %s28 = scalar_select %p27, 0, %s26
      %s29 = sadd.s32 1, %s20
      %s30 = scalar_select %p27, %s29, %s20
      %p31 = scmp.ge.s32.totalorder %s30, 2
      %s32 = scalar_select %p31, 0, %s30
      %s34 = sadd.s32 %s33, 1
      %p37 = scmp.eq.s32.totalorder %s13, 1
      %p38 = scmp.ne.s32.totalorder %s33, %s35
      %p39 = scmp.eq.s32.totalorder %s13, 0
      %p40 = por %p38, %p39
      %p41 = scmp.ne.s32.totalorder %s33, %s35
      %p42 = scmp.eq.s32.totalorder %s18, 1
      %p43 = por %p41, %p42
      %p44 = scmp.ne.s32.totalorder %s35, %s36
      %p45 = scmp.eq.s32.totalorder %s18, 0
      %p46 = por %p44, %p45
      %p47 = scmp.ne.s32.totalorder %s35, %s36
      %p48 = scmp.eq.s32.totalorder %s19, 1
      %p49 = por %p47, %p48
      %p51 = scmp.ne.s32.totalorder %s36, %s50
      %p52 = scmp.eq.s32.totalorder %s19, 0
      %p53 = por %p51, %p52
      %s55 = sadd.s32 %s54, 1
      %p58 = scmp.eq.s32.totalorder %s13, 1
      %p59 = scmp.ne.s32.totalorder %s54, %s56
      %p60 = scmp.eq.s32.totalorder %s13, 0
      %p61 = por %p59, %p60
      %p62 = scmp.ne.s32.totalorder %s54, %s56
      %p63 = scmp.eq.s32.totalorder %s18, 1
      %p64 = por %p62, %p63
      %p65 = scmp.ne.s32.totalorder %s56, %s57
      %p66 = scmp.eq.s32.totalorder %s18, 0
      %p67 = por %p65, %p66
      %p68 = scmp.ne.s32.totalorder %s56, %s57
      %p69 = scmp.eq.s32.totalorder %s19, 1
      %p70 = por %p68, %p69
      %p72 = scmp.ne.s32.totalorder %s57, %s71
      %p73 = scmp.eq.s32.totalorder %s19, 0
      %p74 = por %p72, %p73
      %s75 = sadd.s32 %s20, %s21
      %s76 = sadd.s32 %s32, %s28
      %s77 = ssub.s32 %s75, %s76
      %p78 = scmp.eq.s32.totalorder %s77, 0
      %s80 = sadd.s32 %s79, 1
      %s81 = scalar_select %p78, %s79, %s80
      %p84 = pneg %p78
      %p85 = scmp.eq.s32.totalorder %s13, 1
      %p86 = por %p84, %p85
      %p87 = scmp.ne.s32.totalorder %s79, %s82
      %p88 = scmp.eq.s32.totalorder %s13, 0
      %p89 = por %p87, %p88
      %p90 = scmp.ne.s32.totalorder %s79, %s82
      %p91 = scmp.eq.s32.totalorder %s18, 1
      %p92 = por %p90, %p91
      %p93 = scmp.ne.s32.totalorder %s82, %s83
      %p94 = scmp.eq.s32.totalorder %s18, 0
      %p95 = por %p93, %p94
      %p96 = scmp.ne.s32.totalorder %s82, %s83
      %p97 = scmp.eq.s32.totalorder %s19, 1
      %p98 = por %p96, %p97
      %p100 = scmp.ne.s32.totalorder %s83, %s99
      %p101 = scmp.eq.s32.totalorder %s19, 0
      %p102 = por %p100, %p101
      %s104 = sadd.s32 %s103, 1
      %p107 = scmp.eq.s32.totalorder %s13, 1
      %p108 = scmp.ne.s32.totalorder %s103, %s105
      %p109 = scmp.eq.s32.totalorder %s13, 0
      %p110 = por %p108, %p109
      %p111 = scmp.ne.s32.totalorder %s103, %s105
      %p112 = scmp.eq.s32.totalorder %s18, 1
      %p113 = por %p111, %p112
      %p114 = scmp.ne.s32.totalorder %s105, %s106
      %p115 = scmp.eq.s32.totalorder %s18, 0
      %p116 = por %p114, %p115
      %p117 = scmp.ne.s32.totalorder %s105, %s106
      %p118 = scmp.eq.s32.totalorder %s19, 1
      %p119 = por %p117, %p118
      %p121 = scmp.ne.s32.totalorder %s106, %s120
      %p122 = scmp.eq.s32.totalorder %s19, 0
      %p123 = por %p121, %p122
      %s124 = ssub.s32 %s20, %s32
      %p125 = scmp.eq.s32.totalorder %s124, 0
      %s127 = sadd.s32 %s126, 1
      %s128 = scalar_select %p125, %s126, %s127
      %p131 = pneg %p125
      %p132 = scmp.eq.s32.totalorder %s13, 1
      %p133 = por %p131, %p132
      %p134 = scmp.ne.s32.totalorder %s126, %s129
      %p135 = scmp.eq.s32.totalorder %s13, 0
      %p136 = por %p134, %p135
      %p137 = scmp.ne.s32.totalorder %s126, %s129
      %p138 = scmp.eq.s32.totalorder %s18, 1
      %p139 = por %p137, %p138
      %p140 = scmp.ne.s32.totalorder %s129, %s130
      %p141 = scmp.eq.s32.totalorder %s18, 0
      %p142 = por %p140, %p141
      %p143 = scmp.ne.s32.totalorder %s129, %s130
      %p144 = scmp.eq.s32.totalorder %s19, 1
      %p145 = por %p143, %p144
      %p147 = scmp.ne.s32.totalorder %s130, %s146
      %p148 = scmp.eq.s32.totalorder %s19, 0
      %p149 = por %p147, %p148
      %p150 = scmp.le.s32.totalorder 1, %s13
      %p151 = scmp.lt.s32.totalorder %s13, 3
      %p152 = pnand %p150, %p151
      %p153 = pneg %p152
      // Predicated region
      $region9: #{tpu_custom_call.1} parent=5 // pred_check
        _
      $region10: #{tpu_custom_call.1} parent=5 // pred_check_branch
        %155 = sbr.rel (%p152) target = $region12
      $region11: #{tpu_custom_call.1} parent=5 // pred_region
        %s156 = ssub.s32 %s13, 1
        // Predicated region
        $region13: #{tpu_custom_call.1} parent=11 // pred_check
          %p157 = pneg %p46
        $region14: #{tpu_custom_call.1} parent=11 // pred_check_branch
          %159 = sbr.rel (%p157) target = $region16
        $region15: #{tpu_custom_call.1} parent=11 // pred_region
          _
        $region16: #{tpu_custom_call.1} parent=11 // pred_fallthru
          _
        // Predicated region
        $region17: #{tpu_custom_call.1} parent=11 // pred_check
          %p160 = pneg %p67
        $region18: #{tpu_custom_call.1} parent=11 // pred_check_branch
          %162 = sbr.rel (%p160) target = $region20
        $region19: #{tpu_custom_call.1} parent=11 // pred_region
          _
        $region20: #{tpu_custom_call.1} parent=11 // pred_fallthru
          _
        // Predicated region
        $region21: #{tpu_custom_call.1} parent=11 // pred_check
          %p163 = pneg %p116
        $region22: #{tpu_custom_call.1} parent=11 // pred_check_branch
          %165 = sbr.rel (%p163) target = $region24
        $region23: #{tpu_custom_call.1} parent=11 // pred_region
          _
        $region24: #{tpu_custom_call.1} parent=11 // pred_fallthru
          _
      $region12: #{tpu_custom_call.1} parent=5 // pred_fallthru
        _
      %p166 = scmp.lt.s32.totalorder %s13, 2
      // Predicated region
      $region25: #{tpu_custom_call.1} parent=5 // pred_check
        %p167 = pneg %p166
      $region26: #{tpu_custom_call.1} parent=5 // pred_check_branch
        %169 = sbr.rel (%p167) target = $region28
      $region27: #{tpu_custom_call.1} parent=5 // pred_region
        // Predicated region
        $region29: #{tpu_custom_call.1} parent=27 // pred_check
          %p170 = pneg %p89
        $region30: #{tpu_custom_call.1} parent=27 // pred_check_branch
          %172 = sbr.rel (%p170) target = $region32
        $region31: #{tpu_custom_call.1} parent=27 // pred_region
          %s173 = sadd.s32 %s20, %s21
          %p174 = scmp.lt.s32.totalorder %s173, 1
          %s175 = scalar_select %p174, %s173, 1
          %s176 = smul.addr %s175, 8
          %s177 = scalar_lea.vmem %s2, %s176
          %s178 = sadd.s32 %s20, %s21
        $region32: #{tpu_custom_call.1} parent=27 // pred_fallthru
          _
      $region28: #{tpu_custom_call.1} parent=5 // pred_fallthru
        _
      %p179 = scmp.le.s32.totalorder 1, %s13
      %p180 = scmp.lt.s32.totalorder %s13, 3
      %p181 = pnand %p179, %p180
      %p182 = pneg %p181
      // Predicated region
      $region33: #{tpu_custom_call.1} parent=5 // pred_check
        _
      $region34: #{tpu_custom_call.1} parent=5 // pred_check_branch
        %184 = sbr.rel (%p181) target = $region36
      $region35: #{tpu_custom_call.1} parent=5 // pred_region
        %s185 = ssub.s32 %s13, 1
        %p186 = pneg %p46
        %p187 = pneg %p43
        %p188 = pneg %p67
        %p189 = pneg %p64
        %s190 = sadd.s32 %s22, %s23
        %p191 = scmp.lt.s32.totalorder %s190, 1
        %s192 = scalar_select %p191, %s190, 1
        %s193 = smul.addr %s192, 8
        %s194 = scalar_lea.vmem %s2, %s193
        %p195 = pneg %p95
        %p196 = pneg %p92
        %p197 = pneg %p116
        %p198 = pneg %p113
        %p199 = pneg %p142
        %p200 = pneg %p139
        %s201 = sand.u32 %s129, 1
        %s202 = scalar_lea.sflag [#allocation5], %s201
        %s203 = sand.u32 %s129, 1
        %s204 = smul.addr %s203, 8
        %s205 = scalar_lea.vmem [#allocation4], %s204
        %s206 = sadd.s32 %s22, %s23
        %p207 = scmp.lt.s32.totalorder %s206, 1
        %s208 = scalar_select %p207, %s206, 1
        %s209 = smul.addr %s208, 8
        %s210 = scalar_lea.vmem %s2, %s209
        %s211 = sadd.s32 %s22, %s23
        %p212 = scmp.eq.s32.totalorder %s23, 0
        // Predicated region
        $region37: #{tpu_custom_call.1} parent=35 // pred_check
          %p213 = pneg %p212
        $region38: #{tpu_custom_call.1} parent=35 // pred_check_branch
          %215 = sbr.rel (%p213) target = $region40
        $region39: #{tpu_custom_call.1} parent=35 // pred_region
          %vm216 = vcmask 0
          %217 = vst.msk [vmem:[#allocation2] sm:$0x1] %vm216, 0.0
          %218 = vst.msk [vmem:[#allocation3] sm:$0x1] %vm216, 0.0
        $region40: #{tpu_custom_call.1} parent=35 // pred_fallthru
          _
        %s219 = sadd.s32 %s22, %s23
        %s220 = smul.u32 %s219, 8
        %v221 = vld [vmem:[%s0] sm:$0xff]
        %v222 = vld [vmem:[%s0 + $0x8] sm:$0xff]
        %s223 = scalar_lea.vmem %s0, %s220
        %v224 = vld [vmem:[%s223] sm:$0xff]
        %225 = vmatprep.subr.mxu0 0.0
        %226 = vmatpush1.xpose.msra.mxu0 %v221
        %227 = vmatprep.subr.mxu0 0.0
        %228 = vmatpush1.xpose.msra.mxu0 %v222
        %229 = vmatprep.subr.mxu0 0.0
        %230 = vmatpush1.xpose.msra.mxu0 0.0
        %231 = vmatprep.subr.mxu0 0.0
        %232 = vmatpush1.xpose.msra.mxu0 0.0
        %233 = vmatprep.subr.mxu0 0.0
        %234 = vmatpush1.xpose.msra.mxu0 0.0
        %235 = vmatprep.subr.mxu0 0.0
        %236 = vmatpush1.xpose.msra.mxu0 0.0
        %237 = vmatprep.subr.mxu0 0.0
        %238 = vmatpush1.xpose.msra.mxu0 0.0
        %239 = vmatprep.subr.mxu0 0.0
        %240 = vmatpush1.xpose.msra.mxu0 0.0
        %241 = vmatprep.subr.mxu0 0.0
        %242 = vmatpush1.xpose.msra.mxu0 0.0
        %243 = vmatprep.subr.mxu0 0.0
        %244 = vmatpush1.xpose.msra.mxu0 0.0
        %245 = vmatprep.subr.mxu0 0.0
        %246 = vmatpush1.xpose.msra.mxu0 0.0
        %247 = vmatprep.subr.mxu0 0.0
        %248 = vmatpush1.xpose.msra.mxu0 0.0
        %249 = vmatprep.subr.mxu0 0.0
        %250 = vmatpush1.xpose.msra.mxu0 0.0
        %251 = vmatprep.subr.mxu0 0.0
        %252 = vmatpush1.xpose.msra.mxu0 0.0
        %253 = vmatprep.subr.mxu0 0.0
        %254 = vmatpush1.xpose.msra.mxu0 0.0
        %255 = vmatprep.subr.mxu0 0.0
        %256 = vmatpush1.xpose.msra.mxu0 0.0
        %257 = vmatprep.subr.mxu0 0.0
        %258 = vmatpush1.xpose.msra.mxu0 0.0
        %259 = vmatprep.subr.mxu0 0.0
        %260 = vmatpush1.xpose.msra.mxu0 0.0
        %261 = vmatprep.subr.mxu0 0.0
        %262 = vmatpush1.xpose.msra.mxu0 0.0
        %263 = vmatprep.subr.mxu0 0.0
        %264 = vmatpush1.xpose.msra.mxu0 0.0
        %265 = vmatprep.subr.mxu0 0.0
        %266 = vmatpush1.xpose.msra.mxu0 0.0
        %267 = vmatprep.subr.mxu0 0.0
        %268 = vmatpush1.xpose.msra.mxu0 0.0
        %269 = vmatprep.subr.mxu0 0.0
        %270 = vmatpush1.xpose.msra.mxu0 0.0
        %271 = vmatprep.subr.mxu0 0.0
        %272 = vmatpush1.xpose.msra.mxu0 0.0
        %273 = vmatprep.subr.mxu0 0.0
        %274 = vmatpush1.xpose.msra.mxu0 0.0
        %275 = vmatprep.subr.mxu0 0.0
        %276 = vmatpush1.xpose.msra.mxu0 0.0
        %277 = vmatprep.subr.mxu0 0.0
        %278 = vmatpush1.xpose.msra.mxu0 0.0
        %279 = vmatprep.subr.mxu0 0.0
        %280 = vmatpush1.xpose.msra.mxu0 0.0
        %281 = vmatprep.subr.mxu0 0.0
        %282 = vmatpush1.xpose.msra.mxu0 0.0
        %283 = vmatprep.subr.mxu0 0.0
        %284 = vmatpush1.xpose.msra.mxu0 0.0
        %285 = vmatprep.subr.mxu0 0.0
        %286 = vmatpush1.xpose.msra.mxu0 0.0
        %287 = vmatprep.subr.mxu0 0.0
        %288 = vmatpush1.xpose.msra.mxu0 0.0
        %289 = vmatprep.mubr.f32.mxu0 0.0
        %290 = vmatmul.mubr.f32.gmra.mrb[0].mxu0 %v224
        %v291 = vpop.f32.mrb[0].mxu0
        %v292 = vadd.f32 0.0, %v291
        %v293 = vpop.f32.mrb[0].mxu0
        %294 = vdwg.mxu0
        %v295 = vmul.f32 %v224, %v224
        %296 = vadd.xlane.f32.xlu0 %v295
        %v297 = vpop.xlane.xlu0 %296
        %v298 = vld [vmem:[%s1] sm:$0x1]
        %v300 = vlaneseq
        %v301 = vshrl.u32 %v300, 7
        %v302 = vsub.s32 0, %v301
        %v303 = vrot.slane %v298, %v302
        %v305 = vadd.f32 %v297, %v303
        %v306 = vmul.f32 %v292, 2.0
        %v307 = vsub.f32 %v305, %v306
        %v308 = vmax.f32 %v307, 0.0
        %v309 = vld [vmem:[%s210] sm:$0xff]
        %v310 = vld [vmem:[%s3] sm:$0x1]
        %v311 = vlaneseq
        %v312 = vshrl.u32 %v311, 7
        %v313 = vstv %s220
        %v314 = vadd.s32 %v313, %v312
        %v315 = vlaneseq
        %v316 = vand.u32 %v315, 127
        %vm317 = vcmp.lt.s32.totalorder %v314, %v316
        %vm318 = vcmp.lt.s32.totalorder %v314, 8
        %vm319 = vmand %vm317, %vm318
        %vm320 = vcmp.lt.s32.totalorder %v316, 8
        %vm321 = vmand %vm319, %vm320
        %322 = vset.pattern.permute.xlu0 0
        %323 = vperm.xlu0 %322, %v309
        %v324 = vpop.permute.xlu0 %323
        %v325 = vlaneseq
        %v326 = vshrl.u32 %v325, 7
        %v327 = vsub.s32 0, %v326
        %v328 = vrot.slane %v310, %v327
        %vm329 = vcmp.eq.s32.totalorder %v324, %v328
        %vm330 = vmand %vm321, %vm329
        %v331 = vsel %vm330, 1, 0
        %v332 = vcvt.s32.f32 %v331
        %vm333 = vmxor %vm329, 1
        %vm334 = vmand %vm321, %vm333
        %v335 = vsel %vm334, 1, 0
        %v336 = vcvt.s32.f32 %v335
        %v337 = vmul.f32 %v332, %v308
        %vm338 = vcmask 130048
        %v339 = vsel %vm338, %v337, 0.0
        %340 = vadd.xlane.f32.xlu0 %v339
        %v341 = vpop.xlane.xlu0 %340
        %v342 = vrot.slane %v341, 4
        %v343 = vadd.f32 %v341, %v342
        %v344 = vrot.slane %v343, 2
        %v345 = vadd.f32 %v343, %v344
        %v346 = vrot.slane %v345, 1
        %v347 = vadd.f32 %v345, %v346
        %s348 = vtos %v347
        %v349 = vrsqrt.pop %v308
        %v350 = vmul.f32 %v308, %v349
        %vm351 = vcmp.eq.f32.partialorder %v308, inf
        %v352 = vsel %vm351, %v308, %v350
        %vm353 = vcmp.eq.f32.partialorder %v308, 0.0
        %v354 = vand.u32 %v308, 2147483648
        %v355 = vsel %vm353, %v354, %v352
        %v356 = vsub.f32 1.0, %v355
        %v357 = vmax.f32 %v356, 0.0
        %v358 = vmul.f32 %v357, %v357
        %v359 = vmul.f32 %v336, %v358
        %v360 = vsel %vm338, %v359, 0.0
        %361 = vadd.xlane.f32.xlu0 %v360
        %v362 = vpop.xlane.xlu0 %361
        %v363 = vrot.slane %v362, 4
        %v364 = vadd.f32 %v362, %v363
        %v365 = vrot.slane %v364, 2
        %v366 = vadd.f32 %v364, %v365
        %v367 = vrot.slane %v366, 1
        %v368 = vadd.f32 %v366, %v367
        %s369 = vtos %v368
        %v370 = vsel %vm338, %v332, 0.0
        %371 = vadd.xlane.f32.xlu0 %v370
        %v372 = vpop.xlane.xlu0 %371
        %v373 = vrot.slane %v372, 4
        %v374 = vadd.f32 %v372, %v373
        %v375 = vrot.slane %v374, 2
        %v376 = vadd.f32 %v374, %v375
        %v377 = vrot.slane %v376, 1
        %v378 = vadd.f32 %v376, %v377
        %s379 = vtos %v378
        %v380 = vsel %vm338, %v336, 0.0
        %381 = vadd.xlane.f32.xlu0 %v380
        %v382 = vpop.xlane.xlu0 %381
        %v383 = vrot.slane %v382, 4
        %v384 = vadd.f32 %v382, %v383
        %v385 = vrot.slane %v384, 2
        %v386 = vadd.f32 %v384, %v385
        %v387 = vrot.slane %v386, 1
        %v388 = vadd.f32 %v386, %v387
        %s389 = vtos %v388
        %s390 = sadd.f32 %s379, %s389
        %v391 = vld [vmem:[#allocation2] sm:$0x1]
        %s392 = sadd.f32 %s348, %s369
        %v393 = vstv %s392
        %v394 = vadd.f32 %v391, %v393
        %vm395 = vcmask 0
        %396 = vst.msk [vmem:[#allocation2] sm:$0x1] %vm395, %v394
        %v397 = vld [vmem:[#allocation3] sm:$0x1]
        %v398 = vstv %s390
        %v399 = vadd.f32 %v397, %v398
        %400 = vst.msk [vmem:[#allocation3] sm:$0x1] %vm395, %v399
        // Predicated region
        $region41: #{tpu_custom_call.1} parent=35 // pred_check
          %p401 = pneg %p212
        $region42: #{tpu_custom_call.1} parent=35 // pred_check_branch
          %403 = sbr.rel (%p401) target = $region44
        $region43: #{tpu_custom_call.1} parent=35 // pred_region
          %v404 = vld [vmem:[#allocation2] sm:$0x1]
          %v406 = vlaneseq
          %v407 = vshrl.u32 %v406, 7
          %v408 = vsub.s32 0, %v407
          %v409 = vrot.slane %v404, %v408
          %410 = vset.pattern.permute.xlu0 0
          %411 = vperm.xlu0 %410, %v409
          %v412 = vpop.permute.xlu0 %411
          %v414 = vld [vmem:[#allocation3] sm:$0x1]
          %v416 = vlaneseq
          %v417 = vshrl.u32 %v416, 7
          %v418 = vsub.s32 0, %v417
          %v419 = vrot.slane %v414, %v418
          %420 = vset.pattern.permute.xlu0 0
          %421 = vperm.xlu0 %420, %v419
          %v422 = vpop.permute.xlu0 %421
          %vm424 = vcmp.eq.s32.totalorder %v316, 0
          %v425 = vsel %vm424, %v412, %v422
          %426 = vst [vmem:[%s205] sm:$0xff] %v425
        $region44: #{tpu_custom_call.1} parent=35 // pred_fallthru
          _
        %s427 = sand.u32 %s129, 1
        %s428 = scalar_lea.sflag [#allocation5], %s427
        %s429 = sand.u32 %s129, 1
        %s430 = smul.addr %s429, 8
        %s431 = scalar_lea.vmem [#allocation4], %s430
        // Predicated region
        $region45: #{tpu_custom_call.1} parent=35 // pred_check
          %p432 = pneg %p139
        $region46: #{tpu_custom_call.1} parent=35 // pred_check_branch
          %434 = sbr.rel (%p432) target = $region48
        $region47: #{tpu_custom_call.1} parent=35 // pred_region
          %s436 = ssub.s32 128, 128
          %437 = vsyncadd %s428, %s436
          %s438 = smul.addr %s22, 128
          %s439 = scalar_lea.hbm %s4, %s438
          %s441 = sshll.u32 %s431, 4
          %s442 = int_to_ptr.vmem [resolvable:$true] %s441
          %444 = dma.vmem_to_hbm [thread:$0]  %s442, 128, %s439, %s428
        $region48: #{tpu_custom_call.1} parent=35 // pred_fallthru
          _
      $region36: #{tpu_custom_call.1} parent=5 // pred_fallthru
        _
      %p445 = scmp.le.s32.totalorder 2, %s13
      // Predicated region
      $region49: #{tpu_custom_call.1} parent=5 // pred_check
        %p446 = pneg %p445
      $region50: #{tpu_custom_call.1} parent=5 // pred_check_branch
        %448 = sbr.rel (%p446) target = $region52
      $region51: #{tpu_custom_call.1} parent=5 // pred_region
        %s449 = ssub.s32 %s13, 2
        // Predicated region
        $region53: #{tpu_custom_call.1} parent=51 // pred_check
          %p450 = pneg %p145
        $region54: #{tpu_custom_call.1} parent=51 // pred_check_branch
          %452 = sbr.rel (%p450) target = $region56
        $region55: #{tpu_custom_call.1} parent=51 // pred_region
          %s453 = sand.u32 %s130, 1
          %s454 = scalar_lea.sflag [#allocation5], %s453
          %s455 = sand.u32 %s130, 1
          %s456 = smul.addr %s455, 8
          %s457 = scalar_lea.vmem [#allocation4], %s456
          %458 = dma.done %s454, 128
        $region56: #{tpu_custom_call.1} parent=51 // pred_fallthru
          _
      $region52: #{tpu_custom_call.1} parent=5 // pred_fallthru
        _
    $region6: #{tpu_custom_call.1} parent=1 // loop_footer
      %s17 = sadd.s32 1, %s13
    $region7: #{tpu_custom_call.1} parent=1 // loop_footer_branch
      %12 = sbr.rel target = $region3
    $region8: #{tpu_custom_call.1} parent=1 // loop_exit
      _
    %459 = vsyncpa [#allocation5], 1
    %s460 = scalar_lea.sflag [#allocation5], 1
    %461 = vsyncpa %s460, 1

</llo_original>
